<compile_context>
chip_gen: v7x
topology: tpu7x:2x2x1
jax: 0.10.0
libtpu: 0.0.40
codegen_flags: <defaults>
</compile_context>

<pallas_src>
import functools

import jax
import jax.numpy as jnp
import numpy as np
from jax.experimental import pallas as pl
from jax.experimental.pallas import tpu as pltpu


def _round_up(x: int, m: int) -> int:
    return ((x + m - 1) // m) * m


def _tpu_generation() -> int:
    """Best-effort TPU generation from device_kind (0 if unknown)."""
    try:
        kind = jax.devices()[0].device_kind.lower()
    except Exception:
        return 0
    for g in (7, 6, 5, 4, 3, 2):
        if f"v{g}" in kind:
            return g
    return 0


def _vmem_capacity_bytes(gen: int) -> int:
    try:
        cap = getattr(pltpu.get_tpu_info(), "vmem_capacity_bytes", None)
        if cap:
            return int(cap)
    except Exception:
        pass
    return (64 << 20) if gen >= 7 else (128 << 20)


def _spec(block_shape, index_map, *, buffers=None):
    """BlockSpec with optional pipeline_mode=pl.Buffered(n), falling back cleanly."""
    buffered = getattr(pl, "Buffered", None)
    if buffers is not None and buffered is not None:
        try:
            return pl.BlockSpec(block_shape, index_map, pipeline_mode=buffered(buffers))
        except TypeError:
            pass
    return pl.BlockSpec(block_shape, index_map)


def _choose_tb(n, mk, dp, tf, vmem_budget, bf16_act, target_rows):
    """Batch tile (sequences per grid step) sized from the per-chip VMEM budget."""
    act_bytes = 2 if bf16_act else 4
    per_seq = (2 * mk * dp * 2            # emb tile (bf16), double-buffered
               + 2 * mk * 4               # mask column (f32), double-buffered
               + 2 * 4                    # 1/count column
               + 2 * dp * 4               # out tile (f32), double-buffered
               + mk * dp * 4              # f32 accumulator scratch
               + mk * tf * (4 + act_bytes))   # h intermediate (+ activated copy)
    weight_bytes = 2 * (dp * tf * 2 + tf * 4 + tf * dp * 2) + dp * 4
    avail = vmem_budget - weight_bytes - (6 << 20)     # compiler-scratch headroom
    tb_vmem = max(8, avail // per_seq) if avail > 0 else 8
    tb = min(tb_vmem, max(1, target_rows // mk))
    if tb >= n:
        return n
    return max(8, (tb // 8) * 8)


def _encoder_kernel(*refs, pool: str, mk: int, bf16_act: bool):
    """One grid step = TB sequences x one F-tile of the GELU MLP.

    refs (depending on pool):
      emb_ref : (TB*Mk, Dp) bf16   token(+pos) embeddings, rows flattened
      mask_ref: (TB*Mk, 1)  f32    attention mask column  (avg/max only)
      inv_ref : (TB, 1)     f32    1/token-count per sequence (avg only)
      w1_ref  : (Dp, TF) bf16 ; b1_ref: (1, TF) f32
      w2_ref  : (TF, Dp) bf16 ; b2_ref: (1, Dp) f32
      out_ref : (TB, Dp)    f32    pooled sentence embeddings (lane-dense)
      acc_ref : (TB*Mk, Dp) f32    scratch accumulator over F tiles
    """
    if pool == "avg_pool":
        (emb_ref, mask_ref, inv_ref, w1_ref, b1_ref, w2_ref, b2_ref,
         out_ref, acc_ref) = refs
    elif pool == "max_pool":
        (emb_ref, mask_ref, w1_ref, b1_ref, w2_ref, b2_ref,
         out_ref, acc_ref) = refs
    elif pool == "CLS_pool":
        emb_ref, w1_ref, b1_ref, w2_ref, b2_ref, out_ref, acc_ref = refs
    else:
        raise ValueError(f"unknown pool: {pool}")

    f = pl.program_id(1)

    @pl.when(f == 0)
    def _init():
        acc_ref[...] = jnp.zeros_like(acc_ref)

    # ---- "model": one F-tile of the GELU MLP (MXU, f32 accumulation) --------
    x = emb_ref[...]                                                  # (rows, Dp) bf16
    h = jnp.dot(x, w1_ref[...], preferred_element_type=jnp.float32) + b1_ref[...]
    if bf16_act:
        # v6e/v7x: bf16 VPU/EUP -> ~2x elementwise throughput, half the vregs.
        h = jax.nn.gelu(h.astype(jnp.bfloat16))
    else:
        # v5e: no bf16 VPU/EUP; keep elementwise math in f32.
        h = jax.nn.gelu(h).astype(jnp.bfloat16)
    acc_ref[...] += jnp.dot(h, w2_ref[...], preferred_element_type=jnp.float32)

    # ---- masked pooling epilogue on the last F step --------------------------
    @pl.when(f == pl.num_programs(1) - 1)
    def _finalize():
        hidden = acc_ref[...] + b2_ref[...]                           # (rows, Dp) f32
        rows, dp = hidden.shape
        tb = rows // mk
        if pool == "CLS_pool":
            out_ref[...] = hidden                                     # Mk == 1: rows == TB
        elif pool == "avg_pool":
            hm = hidden * mask_ref[...]                               # (rows,1) bcast over lanes
            s = jnp.sum(hm.reshape(tb, mk, dp), axis=1)               # (TB, Dp)
            out_ref[...] = s * inv_ref[...]                           # padded rows -> 0
        else:  # max_pool
            masked = jnp.where(mask_ref[...] > 0.0, hidden, jnp.float32(-1e9))
            out_ref[...] = jnp.max(masked.reshape(tb, mk, dp), axis=1)


def encoder_forward(params, input_ids, attention_mask, *, pool: str,
                    target_rows: int | None = None, f_tile: int | None = None):
    """Pallas forward: {'input_ids','attention_mask'} -> (N, D) pooled embedding."""
    if pool not in ("CLS_pool", "avg_pool", "max_pool"):
        raise ValueError(pool)
    emb_table, pos_table, w1, b1, w2, b2 = params
    N, M = input_ids.shape
    D = emb_table.shape[1]
    F = w1.shape[1]

    gen = _tpu_generation()
    bf16_act = gen >= 6                              # v5e has no bf16 VPU/EUP
    vmem_cap = _vmem_capacity_bytes(gen)
    vmem_limit = min(int(vmem_cap * 0.85), 112 << 20)  # headroom for compiler scratch
    lane_align = 256 if gen >= 6 else 128            # 2x256 MXU on v6e/v7x

    def _align_dim(d):
        return 128 if d <= 128 else _round_up(d, lane_align)

    Dp = _align_dim(D)
    Fp = _align_dim(F)

    if f_tile is None:
        f_tile = 2048 if vmem_cap >= (100 << 20) else 1024
    f_tile = max(128, _round_up(f_tile, 128))
    TF = min(Fp, f_tile)
    while Fp % TF != 0:                              # TF must tile Fp exactly
        TF -= 128
    n_f = Fp // TF

    if target_rows is None:
        target_rows = 2048 if vmem_cap >= (100 << 20) else 1024

    # Glue: data-dependent embedding gather + positional add stays in JAX/XLA.
    # TODO(synk): fuse the gather into the kernel (scalar-prefetch input_ids +
    # manual row DMA from emb_table kept in pl.ANY) to drop one full HBM round
    # trip of the (rows, Dp) activation; biggest relative win on v5e.
    mask = attention_mask.astype(jnp.float32)
    if pool == "CLS_pool":
        ids = input_ids[:, :1]                       # only token 0 is gathered
        emb = jnp.take(emb_table, ids, axis=0) + pos_table[None, :1, :]
        Mk = 1
    else:
        emb = jnp.take(emb_table, input_ids, axis=0) + pos_table[None, :M, :]
        Mk = _round_up(M, 8)                         # sublane-aligned sequence tile
        emb = jnp.pad(emb, ((0, 0), (0, Mk - M), (0, 0)))
        mask = jnp.pad(mask, ((0, 0), (0, Mk - M)))  # padded tokens masked out

    TB = _choose_tb(N, Mk, Dp, TF, vmem_limit, bf16_act, target_rows)
    Np = _round_up(N, TB)

    # Zero padding is exact for the matmuls (zero contraction rows/cols) and is
    # masked out (avg/max) or sliced off (output) afterwards.
    emb = jnp.pad(emb, ((0, Np - N), (0, 0), (0, Dp - D)))
    emb = emb.reshape(Np * Mk, Dp).astype(jnp.bfloat16)          # flat rows, bf16
    w1p = jnp.pad(w1, ((0, Dp - D), (0, Fp - F))).astype(jnp.bfloat16)
    w2p = jnp.pad(w2, ((0, Fp - F), (0, Dp - D))).astype(jnp.bfloat16)
    b1p = jnp.pad(b1, (0, Fp - F)).astype(jnp.float32)[None, :]
    b2p = jnp.pad(b2, (0, Dp - D)).astype(jnp.float32)[None, :]

    # TODO(synk): bump the emb stream to pl.Buffered(3) if xprof shows its DMA
    # still exposed behind the two dots + GELU.
    operands = [emb]
    in_specs = [pl.BlockSpec((TB * Mk, Dp), lambda n, f: (n, 0))]
    if pool != "CLS_pool":
        mask_col = jnp.pad(mask, ((0, Np - N), (0, 0))).reshape(Np * Mk, 1)
        operands.append(mask_col)
        in_specs.append(pl.BlockSpec((TB * Mk, 1), lambda n, f: (n, 0)))
    if pool == "avg_pool":
        cnt = jnp.sum(attention_mask.astype(jnp.float32), axis=-1, keepdims=True)
        inv = 1.0 / jnp.maximum(cnt, 1e-9)
        inv = jnp.pad(inv, ((0, Np - N), (0, 0)))    # padded batch rows -> output 0
        operands.append(inv)
        in_specs.append(pl.BlockSpec((TB, 1), lambda n, f: (n, 0)))

    w_buf = 1 if n_f == 1 else None                  # single-buffer when grid-invariant
    in_specs += [
        _spec((Dp, TF), lambda n, f: (0, f), buffers=w_buf),   # W1 tile
        _spec((1, TF), lambda n, f: (0, f), buffers=w_buf),    # b1 tile
        _spec((TF, Dp), lambda n, f: (f, 0), buffers=w_buf),   # W2 tile
        _spec((1, Dp), lambda n, f: (0, 0), buffers=1),        # b2 (always invariant)
    ]
    operands += [w1p, b1p, w2p, b2p]

    rows = Np * Mk
    cost = pl.CostEstimate(
        flops=int(4 * rows * Dp * Fp),
        transcendentals=int(rows * Fp),
        bytes_accessed=int(rows * Dp * 2 + rows * 4
                           + 2 * Dp * Fp * 2 + (Fp + Dp) * 4 + Np * Dp * 4))

    kernel = functools.partial(_encoder_kernel, pool=pool, mk=Mk, bf16_act=bf16_act)

    out = pl.pallas_call(
        kernel,
        out_shape=jax.ShapeDtypeStruct((Np, Dp), jnp.float32),
        grid_spec=pltpu.PrefetchScalarGridSpec(
            num_scalar_prefetch=0,
            grid=(Np // TB, n_f),
            in_specs=in_specs,
            out_specs=pl.BlockSpec((TB, Dp), lambda n, f: (n, 0)),
            scratch_shapes=[pltpu.VMEM((TB * Mk, Dp), jnp.float32)],
        ),
        compiler_params=pltpu.CompilerParams(
            dimension_semantics=("parallel", "arbitrary"),
            vmem_limit_bytes=int(vmem_limit)),
        cost_estimate=cost,
    )(*operands)

    return out[:N, :D]                                           # (N, D)


def encoder_forward_ref(params, input_ids, attention_mask, *, pool: str,
                        bf16_act: bool):
    """Pure-JAX reference mirroring the kernel numerics (bf16 matmuls, f32 acc)."""
    emb_table, pos_table, w1, b1, w2, b2 = params
    N, M = input_ids.shape
    emb = jnp.take(emb_table, input_ids, axis=0) + pos_table[None, :M, :]
    h = jnp.einsum("nmd,df->nmf", emb.astype(jnp.bfloat16), w1.astype(jnp.bfloat16),
                   preferred_element_type=jnp.float32) + b1
    if bf16_act:
        h = jax.nn.gelu(h.astype(jnp.bfloat16))
    else:
        h = jax.nn.gelu(h).astype(jnp.bfloat16)
    h = jnp.einsum("nmf,fd->nmd", h, w2.astype(jnp.bfloat16),
                   preferred_element_type=jnp.float32) + b2        # last_hidden_state
    mask = attention_mask.astype(jnp.float32)
    if pool == "CLS_pool":
        return h[:, 0, :]
    if pool == "avg_pool":
        m = mask[..., None]
        return (h * m).sum(axis=1) / jnp.maximum(m.sum(axis=1), 1e-9)
    if pool == "max_pool":
        return jnp.where(mask[..., None] > 0, h, -1e9).max(axis=1)
    raise ValueError(pool)


if __name__ == "__main__":
    gen = _tpu_generation()
    bf16_act = gen >= 6
    # Looser tolerance on the bf16 elementwise path (Mosaic vs XLA tanh impls).
    rtol, atol = (2e-2, 2e-3) if bf16_act else (3e-3, 1e-4)

    def run_case(N, M, D, F, V, **kw):
        key = jax.random.PRNGKey(0)
        ks = jax.random.split(key, 8)
        params = (
            jax.random.normal(ks[0], (V, D), jnp.float32) * 0.02,   # token embeddings
            jax.random.normal(ks[1], (M, D), jnp.float32) * 0.02,   # positional embeddings
            jax.random.normal(ks[2], (D, F), jnp.float32) * 0.1,    # W1
            jax.random.normal(ks[3], (F,), jnp.float32) * 0.1,      # b1
            jax.random.normal(ks[4], (F, D), jnp.float32) * 0.1,    # W2
            jax.random.normal(ks[5], (D,), jnp.float32) * 0.1,      # b2
        )
        input_ids = jax.random.randint(ks[6], (N, M), 0, V, jnp.int32)
        lengths = jax.random.randint(ks[7], (N,), 1, M + 1, jnp.int32)
        attention_mask = (jnp.arange(M)[None, :] < lengths[:, None]).astype(jnp.int32)

        for pool in ("avg_pool", "max_pool", "CLS_pool"):
            out = jax.block_until_ready(
                encoder_forward(params, input_ids, attention_mask, pool=pool, **kw))
            ref = encoder_forward_ref(params, input_ids, attention_mask,
                                      pool=pool, bf16_act=bf16_act)
            assert out.shape == (N, D), (pool, out.shape)
            np.testing.assert_allclose(np.asarray(out), np.asarray(ref),
                                       rtol=rtol, atol=atol)

    # Small shapes implied by the module: N=2 sentences, M=8 tokens, D=32 hidden.
    run_case(N=2, M=8, D=32, F=64, V=50)
    # Larger batch with a small row target: exercises batch tiling / grid > 1.
    run_case(N=80, M=8, D=32, F=64, V=50, target_rows=256)
    # Wider FFN with a small F tile: exercises the F-tiled accumulator path.
    run_case(N=16, M=8, D=32, F=512, V=50, f_tile=256)

    print("KERNEL_OK")
</pallas_src>

<mosaic_0001>
module attributes {stable_mosaic.version = 11 : i64} {
  func.func @_encoder_kernel(%arg0: i32, %arg1: i32, %arg2: memref<16x128xbf16, #tpu.memory_space<vmem>>, %arg3: memref<16x1xf32, #tpu.memory_space<vmem>>, %arg4: memref<2x1xf32, #tpu.memory_space<vmem>>, %arg5: memref<128x128xbf16, #tpu.memory_space<vmem>>, %arg6: memref<1x128xf32, #tpu.memory_space<vmem>>, %arg7: memref<128x128xbf16, #tpu.memory_space<vmem>>, %arg8: memref<1x128xf32, #tpu.memory_space<vmem>>, %arg9: memref<2x128xf32, #tpu.memory_space<vmem>>, %arg10: memref<16x128xf32, #tpu.memory_space<vmem>>) attributes {dimension_semantics = [#tpu.dimension_semantics<parallel>, #tpu.dimension_semantics<arbitrary>], iteration_bounds = array<i64: 1, 1>, scalar_prefetch = 0 : i64, scratch_operands = 1 : i64, tpu.core_type = #tpu.core_type<tc>, window_params = [{transform_indices = @transform_0, window_bounds = array<i64: 16, 128>}, {transform_indices = @transform_1, window_bounds = array<i64: 16, 1>}, {transform_indices = @transform_2, window_bounds = array<i64: 2, 1>}, {pipeline_mode = #tpu.pipeline_mode<synchronous>, transform_indices = @transform_3, window_bounds = array<i64: 128, 128>}, {pipeline_mode = #tpu.pipeline_mode<synchronous>, transform_indices = @transform_4, window_bounds = array<i64: 1, 128>}, {pipeline_mode = #tpu.pipeline_mode<synchronous>, transform_indices = @transform_5, window_bounds = array<i64: 128, 128>}, {pipeline_mode = #tpu.pipeline_mode<synchronous>, transform_indices = @transform_6, window_bounds = array<i64: 1, 128>}, {transform_indices = @transform_7, window_bounds = array<i64: 2, 128>}]} {
    %c0_i32 = arith.constant 0 : i32
    %0 = arith.cmpi eq, %arg1, %c0_i32 : i32
    %1 = arith.extui %0 : i1 to i32
    %c0_i32_0 = arith.constant 0 : i32
    %2 = arith.cmpi ne, %1, %c0_i32_0 : i32
    scf.if %2 {
      %cst_19 = arith.constant 0.000000e+00 : f32
      %31 = vector.broadcast %cst_19 : f32 to vector<16x128xf32>
      %c0_20 = arith.constant 0 : index
      %c0_21 = arith.constant 0 : index
      %32 = vector.load %arg10[%c0_20, %c0_21] : memref<16x128xf32, #tpu.memory_space<vmem>>, vector<16x128xf32>
      tpu.vector_store %arg10[%c0_20, %c0_21], %31 {strides = array<i32>} : memref<16x128xf32, #tpu.memory_space<vmem>>, vector<16x128xf32>,
    } else {
    }
    %c0 = arith.constant 0 : index
    %c0_1 = arith.constant 0 : index
    %3 = vector.load %arg2[%c0, %c0_1] : memref<16x128xbf16, #tpu.memory_space<vmem>>, vector<16x128xbf16>
    %c0_2 = arith.constant 0 : index
    %c0_3 = arith.constant 0 : index
    %4 = vector.load %arg5[%c0_2, %c0_3] : memref<128x128xbf16, #tpu.memory_space<vmem>>, vector<128x128xbf16>
    %cst = arith.constant dense<0.000000e+00> : vector<16x128xf32>
    %5 = tpu.matmul %3, %4, %cst {dimension_numbers = #tpu.dot_dimension_numbers<[1], [0], [0], [1], [0, 0, 1, 1], [], []>} : vector<16x128xbf16>, vector<128x128xbf16>, vector<16x128xf32> -> vector<16x128xf32>
    %c0_4 = arith.constant 0 : index
    %c0_5 = arith.constant 0 : index
    %6 = vector.load %arg6[%c0_4, %c0_5] : memref<1x128xf32, #tpu.memory_space<vmem>>, vector<1x128xf32>
    %7 = vector.broadcast %6 : vector<1x128xf32> to vector<16x128xf32>
    %8 = arith.addf %5, %7 : vector<16x128xf32>
    %9 = arith.mulf %8, %8 : vector<16x128xf32>
    %10 = arith.mulf %8, %9 : vector<16x128xf32>
    %cst_6 = arith.constant 4.471500e-02 : f32
    %11 = vector.broadcast %cst_6 : f32 to vector<16x128xf32>
    %12 = arith.mulf %11, %10 : vector<16x128xf32>
    %13 = arith.addf %8, %12 : vector<16x128xf32>
    %cst_7 = arith.constant 0.797884583 : f32
    %14 = vector.broadcast %cst_7 : f32 to vector<16x128xf32>
    %15 = arith.mulf %14, %13 : vector<16x128xf32>
    %16 = math.tanh %15 : vector<16x128xf32>
    %cst_8 = arith.constant 1.000000e+00 : f32
    %17 = vector.broadcast %cst_8 : f32 to vector<16x128xf32>
    %18 = arith.addf %17, %16 : vector<16x128xf32>
    %cst_9 = arith.constant 5.000000e-01 : f32
    %19 = vector.broadcast %cst_9 : f32 to vector<16x128xf32>
    %20 = arith.mulf %19, %18 : vector<16x128xf32>
    %21 = arith.mulf %8, %20 : vector<16x128xf32>
    %22 = arith.truncf %21 : vector<16x128xf32> to vector<16x128xbf16>
    %c0_10 = arith.constant 0 : index
    %c0_11 = arith.constant 0 : index
    %23 = vector.load %arg10[%c0_10, %c0_11] : memref<16x128xf32, #tpu.memory_space<vmem>>, vector<16x128xf32>
    %c0_12 = arith.constant 0 : index
    %c0_13 = arith.constant 0 : index
    %24 = vector.load %arg7[%c0_12, %c0_13] : memref<128x128xbf16, #tpu.memory_space<vmem>>, vector<128x128xbf16>
    %cst_14 = arith.constant dense<0.000000e+00> : vector<16x128xf32>
    %25 = tpu.matmul %22, %24, %cst_14 {dimension_numbers = #tpu.dot_dimension_numbers<[1], [0], [0], [1], [0, 0, 1, 1], [], []>} : vector<16x128xbf16>, vector<128x128xbf16>, vector<16x128xf32> -> vector<16x128xf32>
    %26 = arith.addf %23, %25 : vector<16x128xf32>
    %c0_15 = arith.constant 0 : index
    %c0_16 = arith.constant 0 : index
    %27 = vector.load %arg10[%c0_15, %c0_16] : memref<16x128xf32, #tpu.memory_space<vmem>>, vector<16x128xf32>
    tpu.vector_store %arg10[%c0_15, %c0_16], %26 {strides = array<i32>} : memref<16x128xf32, #tpu.memory_space<vmem>>, vector<16x128xf32>,
    %c0_i32_17 = arith.constant 0 : i32
    %28 = arith.cmpi eq, %arg1, %c0_i32_17 : i32
    %29 = arith.extui %28 : i1 to i32
    %c0_i32_18 = arith.constant 0 : i32
    %30 = arith.cmpi ne, %29, %c0_i32_18 : i32
    scf.if %30 {
      %c0_19 = arith.constant 0 : index
      %c0_20 = arith.constant 0 : index
      %31 = vector.load %arg10[%c0_19, %c0_20] : memref<16x128xf32, #tpu.memory_space<vmem>>, vector<16x128xf32>
      %c0_21 = arith.constant 0 : index
      %c0_22 = arith.constant 0 : index
      %32 = vector.load %arg8[%c0_21, %c0_22] : memref<1x128xf32, #tpu.memory_space<vmem>>, vector<1x128xf32>
      %33 = vector.broadcast %32 : vector<1x128xf32> to vector<16x128xf32>
      %34 = arith.addf %31, %33 : vector<16x128xf32>
      %c0_23 = arith.constant 0 : index
      %c0_24 = arith.constant 0 : index
      %35 = vector.load %arg3[%c0_23, %c0_24] : memref<16x1xf32, #tpu.memory_space<vmem>>, vector<16x1xf32>
      %36 = vector.broadcast %35 : vector<16x1xf32> to vector<16x128xf32>
      %37 = arith.mulf %34, %36 : vector<16x128xf32>
      %38 = vector.shape_cast %37 : vector<16x128xf32> to vector<2x8x128xf32>
      %cst_25 = arith.constant dense<0.000000e+00> : vector<2x128xf32>
      %39 = vector.multi_reduction <add>, %38, %cst_25 [1] : vector<2x8x128xf32> to vector<2x128xf32>
      %c0_26 = arith.constant 0 : index
      %c0_27 = arith.constant 0 : index
      %40 = vector.load %arg4[%c0_26, %c0_27] : memref<2x1xf32, #tpu.memory_space<vmem>>, vector<2x1xf32>
      %41 = vector.broadcast %40 : vector<2x1xf32> to vector<2x128xf32>
      %42 = arith.mulf %39, %41 : vector<2x128xf32>
      %c0_28 = arith.constant 0 : index
      %c0_29 = arith.constant 0 : index
      %43 = vector.load %arg9[%c0_28, %c0_29] : memref<2x128xf32, #tpu.memory_space<vmem>>, vector<2x128xf32>
      tpu.vector_store %arg9[%c0_28, %c0_29], %42 {strides = array<i32>} : memref<2x128xf32, #tpu.memory_space<vmem>>, vector<2x128xf32>,
    } else {
    }
    return
  }
  func.func @transform_0(%arg0: i32, %arg1: i32) -> (i32, i32) {
    %c0_i32 = arith.constant 0 : i32
    %c0_i32_0 = arith.constant 0 : i32
    return %arg0, %c0_i32 : i32, i32
  }
  func.func @transform_1(%arg0: i32, %arg1: i32) -> (i32, i32) {
    %c0_i32 = arith.constant 0 : i32
    %c0_i32_0 = arith.constant 0 : i32
    return %arg0, %c0_i32 : i32, i32
  }
  func.func @transform_2(%arg0: i32, %arg1: i32) -> (i32, i32) {
    %c0_i32 = arith.constant 0 : i32
    %c0_i32_0 = arith.constant 0 : i32
    return %arg0, %c0_i32 : i32, i32
  }
  func.func @transform_3(%arg0: i32, %arg1: i32) -> (i32, i32) {
    %c0_i32 = arith.constant 0 : i32
    %c0_i32_0 = arith.constant 0 : i32
    return %c0_i32, %arg1 : i32, i32
  }
  func.func @transform_4(%arg0: i32, %arg1: i32) -> (i32, i32) {
    %c0_i32 = arith.constant 0 : i32
    %c0_i32_0 = arith.constant 0 : i32
    return %c0_i32, %arg1 : i32, i32
  }
  func.func @transform_5(%arg0: i32, %arg1: i32) -> (i32, i32) {
    %c0_i32 = arith.constant 0 : i32
    %c0_i32_0 = arith.constant 0 : i32
    return %arg1, %c0_i32 : i32, i32
  }
  func.func @transform_6(%arg0: i32, %arg1: i32) -> (i32, i32) {
    %c0_i32 = arith.constant 0 : i32
    %c0_i32_0 = arith.constant 0 : i32
    %c0_i32_1 = arith.constant 0 : i32
    return %c0_i32, %c0_i32_0 : i32, i32
  }
  func.func @transform_7(%arg0: i32, %arg1: i32) -> (i32, i32) {
    %c0_i32 = arith.constant 0 : i32
    %c0_i32_0 = arith.constant 0 : i32
    return %arg0, %c0_i32 : i32, i32
  }
}

</mosaic_0001>

<llo_original>
// kernel: tpu_custom_call.1
$region0: #{tpu_custom_call.1}
  #allocation0 [shape = 'u32[]', space=smem, size = 0x4, offset = 0x4, fixed_abs, tag = 'smem constant byte address 0x4 - core index']
  #allocation1 [shape = 'u32[144,128]{1,0:T(1,128)}', space=vmem, size = 0x12000, scoped, tag = 'internal scratch']
  #allocation2 [shape = 'f32[16,128]{1,0:T(8,128)}', space=vmem, size = 0x2000, scoped, tag = 'scratch operand']
  %s0 = inlined_call_operand.hbm [shape: bf16[16,128], index: 0, kind: input, shape index: {}]
  %s1 = inlined_call_operand.hbm [shape: f32[16,1], index: 1, kind: input, shape index: {}]
  %s2 = inlined_call_operand.hbm [shape: f32[2,1], index: 2, kind: input, shape index: {}]
  %s3 = inlined_call_operand.hbm [shape: bf16[128,128], index: 3, kind: input, shape index: {}]
  %s4 = inlined_call_operand.hbm [shape: f32[1,128], index: 4, kind: input, shape index: {}]
  %s5 = inlined_call_operand.hbm [shape: bf16[128,128], index: 5, kind: input, shape index: {}]
  %s6 = inlined_call_operand.hbm [shape: f32[1,128], index: 6, kind: input, shape index: {}]
  %s7 = inlined_call_operand.hbm [shape: f32[2,128], index: 7, kind: output, shape index: {}]
  %s8 = sld [smem:[#allocation0]]
  $region74: #{tpu_custom_call.1} parent=0
    _
  %s10 = ssub.s32 1, %s8
  %s11 = scalar_select 0, %s10, %s8
  $region1: #{tpu_custom_call.1} parent=0
    #allocation3 [shape = 'u8[4096]{0}', space=vmem, size = 0x1000, scoped, tag = 'input window, operand 0, single buffered']
    #allocation4 [shape = 's32[1]{0}', space=sflag, size = 0x4, scoped, tag = 'scoped memory for tpu_custom_call.1']
    #allocation5 [shape = 's32[1]{0}', space=sflag, size = 0x4, scoped, tag = 'scoped memory for tpu_custom_call.1']
    #allocation6 [shape = 'u8[8192]{0}', space=vmem, size = 0x2000, scoped, tag = 'input window, operand 1, single buffered']
    #allocation7 [shape = 's32[1]{0}', space=sflag, size = 0x4, scoped, tag = 'scoped memory for tpu_custom_call.1']
    #allocation8 [shape = 'u8[1024]{0}', space=vmem, size = 0x400, scoped, tag = 'input window, operand 2, single buffered']
    #allocation9 [shape = 'u8[32768]{0}', space=vmem, size = 0x8000, scoped, tag = 'input window, operand 3, single buffered']
    #allocation10 [shape = 's32[1]{0}', space=sflag, size = 0x4, scoped, tag = 'scoped memory for tpu_custom_call.1']
    #allocation11 [shape = 'u8[512]{0}', space=vmem, size = 0x400, scoped, tag = 'input window, operand 4, single buffered']
    #allocation12 [shape = 'u8[32768]{0}', space=vmem, size = 0x8000, scoped, tag = 'input window, operand 5, single buffered']
    #allocation13 [shape = 's32[1]{0}', space=sflag, size = 0x4, scoped, tag = 'scoped memory for tpu_custom_call.1']
    #allocation14 [shape = 'u8[512]{0}', space=vmem, size = 0x400, scoped, tag = 'input window, operand 6, single buffered']
    #allocation15 [shape = 'u8[1024]{0}', space=vmem, size = 0x400, scoped, tag = 'output window, operand 0, single buffered']
    %12 = vsyncpa [#allocation4], 0
    %13 = vsyncpa [#allocation7], 0
    %14 = vsyncpa [#allocation10], 0
    %15 = vsyncpa [#allocation13], 0
    %16 = vsyncpa [#allocation5], 0
    // Predicated region
    $region2: #{tpu_custom_call.1} parent=1 // pred_check
      _
    $region3: #{tpu_custom_call.1} parent=1 // pred_check_branch
      %18 = sbr.rel (0) target = $region5
    $region4: #{tpu_custom_call.1} parent=1 // pred_region
      %s20 = ssub.s32 128, 128
      %21 = vsyncadd [#allocation4], %s20
      %s22 = sshll.u32 [#allocation3], 4
      %s23 = int_to_ptr.vmem [resolvable:$true] %s22
      %28 = dma.hbm_to_vmem [thread:$0]  %s0, 128, %s23, [#allocation4], 64, 64, 4
    $region5: #{tpu_custom_call.1} parent=1 // pred_fallthru
      _
    // Predicated region
    $region6: #{tpu_custom_call.1} parent=1 // pred_check
      _
    $region7: #{tpu_custom_call.1} parent=1 // pred_check_branch
      %30 = sbr.rel (0) target = $region9
    $region8: #{tpu_custom_call.1} parent=1 // pred_region
      %s32 = ssub.s32 256, 256
      %33 = vsyncadd [#allocation7], %s32
      %s34 = sshll.u32 [#allocation6], 4
      %s35 = int_to_ptr.vmem [resolvable:$true] %s34
      %40 = dma.hbm_to_vmem [thread:$0]  %s1, 256, %s35, [#allocation7], 128, 128, 8
    $region9: #{tpu_custom_call.1} parent=1 // pred_fallthru
      _
    // Predicated region
    $region10: #{tpu_custom_call.1} parent=1 // pred_check
      _
    $region11: #{tpu_custom_call.1} parent=1 // pred_check_branch
      %42 = sbr.rel (0) target = $region13
    $region12: #{tpu_custom_call.1} parent=1 // pred_region
      %s44 = ssub.s32 32, 32
      %45 = vsyncadd [#allocation7], %s44
      %s47 = sshll.u32 [#allocation8], 4
      %s48 = int_to_ptr.vmem [resolvable:$true] %s47
      %50 = dma.hbm_to_vmem [thread:$0]  %s2, 32, %s48, [#allocation7]
    $region13: #{tpu_custom_call.1} parent=1 // pred_fallthru
      _
    // Predicated region
    $region14: #{tpu_custom_call.1} parent=1 // pred_check
      _
    $region15: #{tpu_custom_call.1} parent=1 // pred_check_branch
      %52 = sbr.rel (0) target = $region17
    $region16: #{tpu_custom_call.1} parent=1 // pred_region
      %s54 = ssub.s32 1024, 1024
      %55 = vsyncadd [#allocation10], %s54
      %s56 = sshll.u32 [#allocation9], 4
      %s57 = int_to_ptr.vmem [resolvable:$true] %s56
      %62 = dma.hbm_to_vmem [thread:$0]  %s3, 1024, %s57, [#allocation10], 64, 64, 4
    $region17: #{tpu_custom_call.1} parent=1 // pred_fallthru
      _
    // Predicated region
    $region18: #{tpu_custom_call.1} parent=1 // pred_check
      _
    $region19: #{tpu_custom_call.1} parent=1 // pred_check_branch
      %64 = sbr.rel (0) target = $region21
    $region20: #{tpu_custom_call.1} parent=1 // pred_region
      %s66 = ssub.s32 16, 16
      %67 = vsyncadd [#allocation10], %s66
      %s69 = sshll.u32 [#allocation11], 4
      %s70 = int_to_ptr.vmem [resolvable:$true] %s69
      %72 = dma.hbm_to_vmem [thread:$0]  %s4, 16, %s70, [#allocation10]
    $region21: #{tpu_custom_call.1} parent=1 // pred_fallthru
      _
    // Predicated region
    $region22: #{tpu_custom_call.1} parent=1 // pred_check
      _
    $region23: #{tpu_custom_call.1} parent=1 // pred_check_branch
      %74 = sbr.rel (0) target = $region25
    $region24: #{tpu_custom_call.1} parent=1 // pred_region
      %s76 = ssub.s32 1024, 1024
      %77 = vsyncadd [#allocation13], %s76
      %s78 = sshll.u32 [#allocation12], 4
      %s79 = int_to_ptr.vmem [resolvable:$true] %s78
      %84 = dma.hbm_to_vmem [thread:$0]  %s5, 1024, %s79, [#allocation13], 64, 64, 4
    $region25: #{tpu_custom_call.1} parent=1 // pred_fallthru
      _
    // Predicated region
    $region26: #{tpu_custom_call.1} parent=1 // pred_check
      _
    $region27: #{tpu_custom_call.1} parent=1 // pred_check_branch
      %86 = sbr.rel (0) target = $region29
    $region28: #{tpu_custom_call.1} parent=1 // pred_region
      %s88 = ssub.s32 16, 16
      %89 = vsyncadd [#allocation13], %s88
      %s91 = sshll.u32 [#allocation14], 4
      %s92 = int_to_ptr.vmem [resolvable:$true] %s91
      %94 = dma.hbm_to_vmem [thread:$0]  %s6, 16, %s92, [#allocation13]
    $region29: #{tpu_custom_call.1} parent=1 // pred_fallthru
      _
    // Predicated region
    $region30: #{tpu_custom_call.1} parent=1 // pred_check
      _
    $region31: #{tpu_custom_call.1} parent=1 // pred_check_branch
      %96 = sbr.rel (0) target = $region33
    $region32: #{tpu_custom_call.1} parent=1 // pred_region
      %97 = dma.done [#allocation4], 128
    $region33: #{tpu_custom_call.1} parent=1 // pred_fallthru
      _
    // Predicated region
    $region34: #{tpu_custom_call.1} parent=1 // pred_check
      _
    $region35: #{tpu_custom_call.1} parent=1 // pred_check_branch
      %99 = sbr.rel (0) target = $region37
    $region36: #{tpu_custom_call.1} parent=1 // pred_region
      %100 = dma.done [#allocation7], 256
    $region37: #{tpu_custom_call.1} parent=1 // pred_fallthru
      _
    // Predicated region
    $region38: #{tpu_custom_call.1} parent=1 // pred_check
      _
    $region39: #{tpu_custom_call.1} parent=1 // pred_check_branch
      %102 = sbr.rel (0) target = $region41
    $region40: #{tpu_custom_call.1} parent=1 // pred_region
      %103 = dma.done [#allocation7], 32
    $region41: #{tpu_custom_call.1} parent=1 // pred_fallthru
      _
    // Predicated region
    $region42: #{tpu_custom_call.1} parent=1 // pred_check
      _
    $region43: #{tpu_custom_call.1} parent=1 // pred_check_branch
      %105 = sbr.rel (0) target = $region45
    $region44: #{tpu_custom_call.1} parent=1 // pred_region
      %106 = dma.done [#allocation10], 1024
    $region45: #{tpu_custom_call.1} parent=1 // pred_fallthru
      _
    // Predicated region
    $region46: #{tpu_custom_call.1} parent=1 // pred_check
      _
    $region47: #{tpu_custom_call.1} parent=1 // pred_check_branch
      %108 = sbr.rel (0) target = $region49
    $region48: #{tpu_custom_call.1} parent=1 // pred_region
      %109 = dma.done [#allocation10], 16
    $region49: #{tpu_custom_call.1} parent=1 // pred_fallthru
      _
    // Predicated region
    $region50: #{tpu_custom_call.1} parent=1 // pred_check
      _
    $region51: #{tpu_custom_call.1} parent=1 // pred_check_branch
      %111 = sbr.rel (0) target = $region53
    $region52: #{tpu_custom_call.1} parent=1 // pred_region
      %112 = dma.done [#allocation13], 1024
    $region53: #{tpu_custom_call.1} parent=1 // pred_fallthru
      _
    // Predicated region
    $region54: #{tpu_custom_call.1} parent=1 // pred_check
      _
    $region55: #{tpu_custom_call.1} parent=1 // pred_check_branch
      %114 = sbr.rel (0) target = $region57
    $region56: #{tpu_custom_call.1} parent=1 // pred_region
      %115 = dma.done [#allocation13], 16
    $region57: #{tpu_custom_call.1} parent=1 // pred_fallthru
      _
    %p117 = scmp.eq.s32.totalorder 0, 0
    // Predicated region
    $region58: #{tpu_custom_call.1} parent=1 // pred_check
      %p118 = pneg %p117
    $region59: #{tpu_custom_call.1} parent=1 // pred_check_branch
      %120 = sbr.rel (%p118) target = $region61
    $region60: #{tpu_custom_call.1} parent=1 // pred_region
      %121 = vst [vmem:[#allocation2] sm:$0xff] 0.0
      %122 = vst [vmem:[#allocation2 + $0x8] sm:$0xff] 0.0
    $region61: #{tpu_custom_call.1} parent=1 // pred_fallthru
      _
    %v123 = vld [vmem:[#allocation3] sm:$0xf]
    %v124 = vld [vmem:[#allocation3 + $0x4] sm:$0xf]
    %v125 = vld [vmem:[#allocation9] sm:$0xf]
    %v126 = vld [vmem:[#allocation9 + $0x4] sm:$0xf]
    %v127 = vld [vmem:[#allocation9 + $0x8] sm:$0xf]
    %v128 = vld [vmem:[#allocation9 + $0xc] sm:$0xf]
    %v129 = vld [vmem:[#allocation9 + $0x10] sm:$0xf]
    %v130 = vld [vmem:[#allocation9 + $0x14] sm:$0xf]
    %v131 = vld [vmem:[#allocation9 + $0x18] sm:$0xf]
    %v132 = vld [vmem:[#allocation9 + $0x1c] sm:$0xf]
    %v133 = vld [vmem:[#allocation9 + $0x20] sm:$0xf]
    %v134 = vld [vmem:[#allocation9 + $0x24] sm:$0xf]
    %v135 = vld [vmem:[#allocation9 + $0x28] sm:$0xf]
    %v136 = vld [vmem:[#allocation9 + $0x2c] sm:$0xf]
    %v137 = vld [vmem:[#allocation9 + $0x30] sm:$0xf]
    %v138 = vld [vmem:[#allocation9 + $0x34] sm:$0xf]
    %v139 = vld [vmem:[#allocation9 + $0x38] sm:$0xf]
    %v140 = vld [vmem:[#allocation9 + $0x3c] sm:$0xf]
    %v141 = vld [vmem:[#allocation11] sm:$0x1]
    %v143 = vlaneseq
    %v144 = vshrl.u32 %v143, 7
    %v145 = vsub.s32 0, %v144
    %v146 = vrot.slane %v141, %v145
    %v150 = vunpack.c.l.b16 %v123
    %v151 = vunpack.c.l.b16 %v124
    %v152 = vpack.c.b16 %v151, %v150
    %v170 = vunpack.c.l.b16 %v125
    %v171 = vunpack.c.l.b16 %v126
    %v172 = vunpack.c.l.b16 %v127
    %v173 = vunpack.c.l.b16 %v128
    %v174 = vunpack.c.l.b16 %v129
    %v175 = vunpack.c.l.b16 %v130
    %v176 = vunpack.c.l.b16 %v131
    %v177 = vunpack.c.l.b16 %v132
    %v178 = vunpack.c.l.b16 %v133
    %v179 = vunpack.c.l.b16 %v134
    %v180 = vunpack.c.l.b16 %v135
    %v181 = vunpack.c.l.b16 %v136
    %v182 = vunpack.c.l.b16 %v137
    %v183 = vunpack.c.l.b16 %v138
    %v184 = vunpack.c.l.b16 %v139
    %v185 = vunpack.c.l.b16 %v140
    %v186 = vpack.c.b16 %v171, %v170
    %v187 = vpack.c.b16 %v173, %v172
    %v188 = vpack.c.b16 %v175, %v174
    %v189 = vpack.c.b16 %v177, %v176
    %v190 = vpack.c.b16 %v179, %v178
    %v191 = vpack.c.b16 %v181, %v180
    %v192 = vpack.c.b16 %v183, %v182
    %v193 = vpack.c.b16 %v185, %v184
    %202 = vmatprep.subr.bf16.mxu0 0
    %203 = vmatpush1.bf16.msra.mxu0 %v186
    %204 = vmatprep.subr.bf16.mxu0 0
    %205 = vmatpush1.bf16.msra.mxu0 %v187
    %206 = vmatprep.subr.bf16.mxu0 0
    %207 = vmatpush1.bf16.msra.mxu0 %v188
    %208 = vmatprep.subr.bf16.mxu0 0
    %209 = vmatpush1.bf16.msra.mxu0 %v189
    %210 = vmatprep.subr.bf16.mxu0 0
    %211 = vmatpush1.bf16.msra.mxu0 %v190
    %212 = vmatprep.subr.bf16.mxu0 0
    %213 = vmatpush1.bf16.msra.mxu0 %v191
    %214 = vmatprep.subr.bf16.mxu0 0
    %215 = vmatpush1.bf16.msra.mxu0 %v192
    %216 = vmatprep.subr.bf16.mxu0 0
    %217 = vmatpush1.bf16.msra.mxu0 %v193
    %218 = vmatprep.subr.bf16.mxu0 0
    %219 = vmatpush1.bf16.msra.mxu0 0
    %220 = vmatprep.subr.bf16.mxu0 0
    %221 = vmatpush1.bf16.msra.mxu0 0
    %222 = vmatprep.subr.bf16.mxu0 0
    %223 = vmatpush1.bf16.msra.mxu0 0
    %224 = vmatprep.subr.bf16.mxu0 0
    %225 = vmatpush1.bf16.msra.mxu0 0
    %226 = vmatprep.subr.bf16.mxu0 0
    %227 = vmatpush1.bf16.msra.mxu0 0
    %228 = vmatprep.subr.bf16.mxu0 0
    %229 = vmatpush1.bf16.msra.mxu0 0
    %230 = vmatprep.subr.bf16.mxu0 0
    %231 = vmatpush1.bf16.msra.mxu0 0
    %232 = vmatprep.subr.bf16.mxu0 0
    %233 = vmatpush1.bf16.msra.mxu0 0
    %234 = vmatprep.mubr.bf16.mxu0 0
    %235 = vmatmul.mubr.bf16.gmra.mrb[0].mxu0 %v152
    %v236 = vpop.f32.mrb[0].mxu0
    %v237 = vadd.f32 %v146, %v236
    %v238 = vpop.f32.mrb[0].mxu0
    %v239 = vpop.f32.mrb[0].mxu0
    %v240 = vadd.f32 %v146, %v239
    %v241 = vpop.f32.mrb[0].mxu0
    %242 = vdwg.mxu0
    %v243 = vmul.f32 %v237, %v237
    %v244 = vmul.f32 %v240, %v240
    %v245 = vmul.f32 %v237, %v243
    %v246 = vmul.f32 %v240, %v244
    %v247 = vmul.f32 %v245, 0.044715
    %v248 = vmul.f32 %v246, 0.044715
    %v249 = vadd.f32 %v237, %v247
    %v250 = vadd.f32 %v240, %v248
    %v251 = vmul.f32 %v249, 0.7978846
    %v252 = vmul.f32 %v250, 0.7978846
    %v253 = vtanh.pop %v251
    %v254 = vtanh.pop %v252
    %v255 = vadd.f32 %v253, 1.0
    %v256 = vadd.f32 %v254, 1.0
    %v257 = vmul.f32 %v255, 0.5
    %v258 = vmul.f32 %v256, 0.5
    %v259 = vmul.f32 %v237, %v257
    %v260 = vmul.f32 %v240, %v258
    %v261 = vpack.c.bf16 %v260, %v259
    %v262 = vld [vmem:[#allocation2] sm:$0xff]
    %v263 = vld [vmem:[#allocation2 + $0x8] sm:$0xff]
    %v264 = vld [vmem:[#allocation12] sm:$0xf]
    %v265 = vld [vmem:[#allocation12 + $0x4] sm:$0xf]
    %v266 = vld [vmem:[#allocation12 + $0x8] sm:$0xf]
    %v267 = vld [vmem:[#allocation12 + $0xc] sm:$0xf]
    %v268 = vld [vmem:[#allocation12 + $0x10] sm:$0xf]
    %v269 = vld [vmem:[#allocation12 + $0x14] sm:$0xf]
    %v270 = vld [vmem:[#allocation12 + $0x18] sm:$0xf]
    %v271 = vld [vmem:[#allocation12 + $0x1c] sm:$0xf]
    %v272 = vld [vmem:[#allocation12 + $0x20] sm:$0xf]
    %v273 = vld [vmem:[#allocation12 + $0x24] sm:$0xf]
    %v274 = vld [vmem:[#allocation12 + $0x28] sm:$0xf]
    %v275 = vld [vmem:[#allocation12 + $0x2c] sm:$0xf]
    %v276 = vld [vmem:[#allocation12 + $0x30] sm:$0xf]
    %v277 = vld [vmem:[#allocation12 + $0x34] sm:$0xf]
    %v278 = vld [vmem:[#allocation12 + $0x38] sm:$0xf]
    %v279 = vld [vmem:[#allocation12 + $0x3c] sm:$0xf]
    %v296 = vunpack.c.l.b16 %v264
    %v297 = vunpack.c.l.b16 %v265
    %v298 = vunpack.c.l.b16 %v266
    %v299 = vunpack.c.l.b16 %v267
    %v300 = vunpack.c.l.b16 %v268
    %v301 = vunpack.c.l.b16 %v269
    %v302 = vunpack.c.l.b16 %v270
    %v303 = vunpack.c.l.b16 %v271
    %v304 = vunpack.c.l.b16 %v272
    %v305 = vunpack.c.l.b16 %v273
    %v306 = vunpack.c.l.b16 %v274
    %v307 = vunpack.c.l.b16 %v275
    %v308 = vunpack.c.l.b16 %v276
    %v309 = vunpack.c.l.b16 %v277
    %v310 = vunpack.c.l.b16 %v278
    %v311 = vunpack.c.l.b16 %v279
    %v312 = vpack.c.b16 %v297, %v296
    %v313 = vpack.c.b16 %v299, %v298
    %v314 = vpack.c.b16 %v301, %v300
    %v315 = vpack.c.b16 %v303, %v302
    %v316 = vpack.c.b16 %v305, %v304
    %v317 = vpack.c.b16 %v307, %v306
    %v318 = vpack.c.b16 %v309, %v308
    %v319 = vpack.c.b16 %v311, %v310
    %328 = vmatprep.subr.bf16.mxu0 0
    %329 = vmatpush1.bf16.msra.mxu0 %v312
    %330 = vmatprep.subr.bf16.mxu0 0
    %331 = vmatpush1.bf16.msra.mxu0 %v313
    %332 = vmatprep.subr.bf16.mxu0 0
    %333 = vmatpush1.bf16.msra.mxu0 %v314
    %334 = vmatprep.subr.bf16.mxu0 0
    %335 = vmatpush1.bf16.msra.mxu0 %v315
    %336 = vmatprep.subr.bf16.mxu0 0
    %337 = vmatpush1.bf16.msra.mxu0 %v316
    %338 = vmatprep.subr.bf16.mxu0 0
    %339 = vmatpush1.bf16.msra.mxu0 %v317
    %340 = vmatprep.subr.bf16.mxu0 0
    %341 = vmatpush1.bf16.msra.mxu0 %v318
    %342 = vmatprep.subr.bf16.mxu0 0
    %343 = vmatpush1.bf16.msra.mxu0 %v319
    %344 = vmatprep.subr.bf16.mxu0 0
    %345 = vmatpush1.bf16.msra.mxu0 0
    %346 = vmatprep.subr.bf16.mxu0 0
    %347 = vmatpush1.bf16.msra.mxu0 0
    %348 = vmatprep.subr.bf16.mxu0 0
    %349 = vmatpush1.bf16.msra.mxu0 0
    %350 = vmatprep.subr.bf16.mxu0 0
    %351 = vmatpush1.bf16.msra.mxu0 0
    %352 = vmatprep.subr.bf16.mxu0 0
    %353 = vmatpush1.bf16.msra.mxu0 0
    %354 = vmatprep.subr.bf16.mxu0 0
    %355 = vmatpush1.bf16.msra.mxu0 0
    %356 = vmatprep.subr.bf16.mxu0 0
    %357 = vmatpush1.bf16.msra.mxu0 0
    %358 = vmatprep.subr.bf16.mxu0 0
    %359 = vmatpush1.bf16.msra.mxu0 0
    %360 = vmatprep.mubr.bf16.mxu0 0
    %361 = vmatmul.mubr.bf16.gmra.mrb[0].mxu0 %v261
    %v362 = vpop.f32.mrb[0].mxu0
    %v363 = vadd.f32 0.0, %v362
    %v364 = vpop.f32.mrb[0].mxu0
    %v365 = vpop.f32.mrb[0].mxu0
    %v366 = vadd.f32 0.0, %v365
    %v367 = vpop.f32.mrb[0].mxu0
    %368 = vdwg.mxu0
    %v369 = vadd.f32 %v262, %v363
    %v370 = vadd.f32 %v263, %v366
    %371 = vst [vmem:[#allocation2] sm:$0xff] %v369
    %372 = vst [vmem:[#allocation2 + $0x8] sm:$0xff] %v370
    // Predicated region
    $region62: #{tpu_custom_call.1} parent=1 // pred_check
      %p373 = pneg %p117
    $region63: #{tpu_custom_call.1} parent=1 // pred_check_branch
      %375 = sbr.rel (%p373) target = $region65
    $region64: #{tpu_custom_call.1} parent=1 // pred_region
      %v376 = vld [vmem:[#allocation2] sm:$0xff]
      %v377 = vld [vmem:[#allocation2 + $0x8] sm:$0xff]
      %v378 = vld [vmem:[#allocation14] sm:$0x1]
      %v380 = vlaneseq
      %v381 = vshrl.u32 %v380, 7
      %v382 = vsub.s32 0, %v381
      %v383 = vrot.slane %v378, %v382
      %v385 = vadd.f32 %v376, %v383
      %v386 = vadd.f32 %v377, %v383
      %v387 = vld [vmem:[#allocation6] sm:$0xff]
      %v388 = vld [vmem:[#allocation6 + $0x8] sm:$0xff]
      %390 = vset.pattern.permute.xlu0 0
      %391 = vperm.xlu0 %390, %v387
      %v392 = vpop.permute.xlu0 %391
      %395 = vset.pattern.permute.xlu0 0
      %396 = vperm.xlu0 %395, %v388
      %v397 = vpop.permute.xlu0 %396
      %v399 = vmul.f32 %v385, %v392
      %v400 = vmul.f32 %v386, %v397
      %v401 = vrot.slane %v399, 4
      %v402 = vadd.f32 %v399, %v401
      %v403 = vrot.slane %v402, 2
      %v404 = vadd.f32 %v402, %v403
      %v405 = vrot.slane %v404, 1
      %v406 = vadd.f32 %v404, %v405
      %v407 = vrot.slane %v400, 4
      %v408 = vadd.f32 %v400, %v407
      %v409 = vrot.slane %v408, 2
      %v410 = vadd.f32 %v408, %v409
      %v411 = vrot.slane %v410, 1
      %v412 = vadd.f32 %v410, %v411
      %v413 = vld [vmem:[#allocation8] sm:$0x3]
      %415 = vset.pattern.permute.xlu0 0
      %416 = vperm.xlu0 %415, %v413
      %v417 = vpop.permute.xlu0 %416
      %v418 = vrot.slane %v417, 1
      %v421 = vmul.f32 %v406, %v417
      %v422 = vmul.f32 %v412, %v418
      %v425 = vrot.slane %v422, 7
      %vm426 = vcmask 1041409
      %v427 = vsel %vm426, %v425, %v421
      %429 = vst [vmem:[#allocation15] sm:$0x3] %v427
    $region65: #{tpu_custom_call.1} parent=1 // pred_fallthru
      _
    // Predicated region
    $region66: #{tpu_custom_call.1} parent=1 // pred_check
      _
    $region67: #{tpu_custom_call.1} parent=1 // pred_check_branch
      %431 = sbr.rel (0) target = $region69
    $region68: #{tpu_custom_call.1} parent=1 // pred_region
      %s433 = ssub.s32 32, 32
      %434 = vsyncadd [#allocation5], %s433
      %s436 = sshll.u32 [#allocation15], 4
      %s437 = int_to_ptr.vmem [resolvable:$true] %s436
      %439 = dma.vmem_to_hbm [thread:$0]  %s437, 32, %s7, [#allocation5]
    $region69: #{tpu_custom_call.1} parent=1 // pred_fallthru
      _
    // Predicated region
    $region70: #{tpu_custom_call.1} parent=1 // pred_check
      _
    $region71: #{tpu_custom_call.1} parent=1 // pred_check_branch
      %441 = sbr.rel (0) target = $region73
    $region72: #{tpu_custom_call.1} parent=1 // pred_region
      %442 = dma.done [#allocation5], 32
    $region73: #{tpu_custom_call.1} parent=1 // pred_fallthru
      _
    %443 = vsyncpa [#allocation4], 1
    %444 = vsyncpa [#allocation7], 1
    %445 = vsyncpa [#allocation10], 1
    %446 = vsyncpa [#allocation13], 1
    %447 = vsyncpa [#allocation5], 1

</llo_original>
